<compile_context>
chip_gen: v7x
topology: tpu7x:2x2x1
jax: 0.10.0
libtpu: 0.0.40
codegen_flags: <defaults>
</compile_context>

<pallas_src>
import functools
import math

import jax
import jax.numpy as jnp
from jax import lax
from jax.experimental import pallas as pl
from jax.experimental.pallas import tpu as pltpu


# --------------------------------------------------------------------------
# Prologue kernel: per-node src/dst projections (MXU), hoisted out of the
# (i, j) pairwise tile loop.
# --------------------------------------------------------------------------
def proj_kernel(h_ref, wsrc_ref, bsrc_ref, wdst_ref, bdst_ref, hs_ref, hd_ref):
    x = h_ref[0]                                                  # (T, D)
    hs_ref[0] = (jnp.dot(x, wsrc_ref[...], preferred_element_type=jnp.float32)
                 + bsrc_ref[...])
    hd_ref[0] = (jnp.dot(x, wdst_ref[...], preferred_element_type=jnp.float32)
                 + bdst_ref[...])


# --------------------------------------------------------------------------
# Pairwise edge kernel: H-loop with a lane-dense (Ti, Tj) accumulator, one
# sigmoid, hard Bernoulli sample via threshold, diagonal mask on i == j tiles.
# --------------------------------------------------------------------------
def edge_kernel(bout_ref, wout_ref, hs_ref, hdt_ref, noise_ref, adj_ref, *,
                hidden):
    hs = hs_ref[0]                                                # (Ti, H)
    hd_t = hdt_ref[0]                                             # (H, Tj)
    ti = adj_ref.shape[1]
    tj = adj_ref.shape[2]

    # z[a, b] = b_out + sum_k w_out[k] * relu(hs[a, k] + hd_t[k, b])
    # No (Ti, Tj, H) temporary; pure lane-dense VALU work (Tj on lanes).
    # `hidden` is static, so the loop unrolls with static slices.
    acc = jnp.zeros((ti, tj), jnp.float32)
    for k in range(hidden):
        pair = hs[:, k:k + 1] + hd_t[k:k + 1, :]                  # (Ti, Tj)
        acc = acc + wout_ref[k] * jnp.maximum(pair, 0.0)
    z = acc + bout_ref[0]

    # Module quirk kept on purpose: sigmoid(z) is fed as the RelaxedBernoulli
    # *logits*.  Hard sample: for tau > 0,
    #   round(sigmoid((logits + noise)/tau)) == (logits + noise >= 0).
    logits = jax.nn.sigmoid(z)
    adj = jnp.where(logits + noise_ref[0] >= 0.0, 1.0, 0.0)

    i = pl.program_id(1)
    j = pl.program_id(2)

    @pl.when(i == j)
    def _():
        # Diagonal (no self-edge) mask only needed on diagonal tiles.
        r = lax.broadcasted_iota(jnp.int32, (ti, tj), 0)
        c = lax.broadcasted_iota(jnp.int32, (ti, tj), 1)
        adj_ref[0] = jnp.where(r == c, 0.0, adj).astype(adj_ref.dtype)

    @pl.when(i != j)
    def _():
        adj_ref[0] = adj.astype(adj_ref.dtype)


# --------------------------------------------------------------------------
# Wrapper
# --------------------------------------------------------------------------
def edge_predictor_forward(h, params, tau=1.0, *, noise=None, key=None,
                           tile=128, out_dtype=jnp.float32):
    """Forward pass of EdgePredictor_per_node.

    If `noise` is None, logistic noise for the RelaxedBernoulli rsample is
    drawn with jax.random (pass `key`).  Otherwise `noise` must be a
    (B, N, N) f32 array of Logistic(0, 1) samples (deterministic test path).

    Note: the forward value is the hard straight-through sample, which for
    any tau > 0 does not depend on tau; `tau` is kept for API fidelity only.
    """
    del tau  # hard sample is tau-independent for tau > 0 (see module quirk)
    B, N, D = h.shape
    H = params["w_src"].shape[0]
    T = N if N <= tile else tile
    assert N % T == 0, "N must be a multiple of the tile size"

    if noise is None:
        if key is None:
            key = jax.random.PRNGKey(0)
        u = jax.random.uniform(key, (B, N, N), jnp.float32,
                               minval=1e-6, maxval=1.0 - 1e-6)
        noise = jnp.log(u) - jnp.log1p(-u)                # Logistic(0, 1)

    w_src = params["w_src"].T.astype(jnp.float32)         # (D, H)
    w_dst = params["w_dst"].T.astype(jnp.float32)         # (D, H)
    b_src = params["b_src"].reshape(1, H).astype(jnp.float32)
    b_dst = params["b_dst"].reshape(1, H).astype(jnp.float32)
    w_out = params["w_out"].reshape(H).astype(jnp.float32)    # SMEM vector
    b_out = params["b_out"].reshape(1).astype(jnp.float32)    # SMEM scalar

    # ---- prologue: hs = h @ w_src + b_src, hd = h @ w_dst + b_dst ---------
    h_spec = pl.BlockSpec((1, T, D), lambda b, n: (b, n, 0))
    w_spec = pl.BlockSpec((D, H), lambda b, n: (0, 0))
    bias_spec = pl.BlockSpec((1, H), lambda b, n: (0, 0))
    proj_out_spec = pl.BlockSpec((1, T, H), lambda b, n: (b, n, 0))

    hs, hd = pl.pallas_call(
        proj_kernel,
        out_shape=(jax.ShapeDtypeStruct((B, N, H), jnp.float32),
                   jax.ShapeDtypeStruct((B, N, H), jnp.float32)),
        grid=(B, N // T),
        in_specs=[h_spec, w_spec, bias_spec, w_spec, bias_spec],
        out_specs=(proj_out_spec, proj_out_spec),
        compiler_params=pltpu.CompilerParams(
            dimension_semantics=("parallel", "parallel")),
    )(h, w_src, b_src, w_dst, b_dst)

    # One-time XLA relayout so the dst dimension (Tj) sits on lanes inside the
    # pairwise H-loop (avoids a per-tile transpose in the hot kernel).
    hd_t = jnp.swapaxes(hd, 1, 2)                          # (B, H, N)

    # ---- pairwise kernel ---------------------------------------------------
    smem_spec = pl.BlockSpec(memory_space=pltpu.MemorySpace.SMEM)
    hs_spec = pl.BlockSpec((1, T, H), lambda b, i, j: (b, i, 0))
    hdt_spec = pl.BlockSpec((1, H, T), lambda b, i, j: (b, 0, j))
    nz_spec = pl.BlockSpec((1, T, T), lambda b, i, j: (b, i, j))
    out_spec = pl.BlockSpec((1, T, T), lambda b, i, j: (b, i, j))

    return pl.pallas_call(
        functools.partial(edge_kernel, hidden=H),
        out_shape=jax.ShapeDtypeStruct((B, N, N), out_dtype),
        grid=(B, N // T, N // T),
        in_specs=[smem_spec, smem_spec, hs_spec, hdt_spec, nz_spec],
        out_specs=out_spec,
        compiler_params=pltpu.CompilerParams(
            dimension_semantics=("parallel", "parallel", "parallel")),
    )(b_out, w_out, hs, hd_t, noise)


# --------------------------------------------------------------------------
# Init + pure-JAX reference (mirrors the PyTorch forward)
# --------------------------------------------------------------------------
def init_params(key, dim_in_time, dim_in_node, hidden):
    """Deterministic init matching nn.Linear.reset_parameters bounds."""
    D = dim_in_time + dim_in_node
    ks = jax.random.split(key, 6)
    b1 = 1.0 / math.sqrt(D)
    b2 = 1.0 / math.sqrt(hidden)
    return dict(
        w_src=jax.random.uniform(ks[0], (hidden, D), jnp.float32, -b1, b1),
        b_src=jax.random.uniform(ks[1], (hidden,), jnp.float32, -b1, b1),
        w_dst=jax.random.uniform(ks[2], (hidden, D), jnp.float32, -b1, b1),
        b_dst=jax.random.uniform(ks[3], (hidden,), jnp.float32, -b1, b1),
        w_out=jax.random.uniform(ks[4], (1, hidden), jnp.float32, -b2, b2),
        b_out=jax.random.uniform(ks[5], (1,), jnp.float32, -b2, b2),
    )


def reference_forward(h, params, noise, tau=1.0):
    """Pure-JAX mirror of the PyTorch forward. Returns (adj, decision margin)."""
    N = h.shape[1]
    hs = h @ params["w_src"].T + params["b_src"]
    hd = h @ params["w_dst"].T + params["b_dst"]
    edge = jax.nn.relu(hs[:, :, None, :] + hd[:, None, :, :])
    z = jnp.squeeze(edge @ params["w_out"].T, -1) + params["b_out"][0]
    logits = jax.nn.sigmoid(z)
    soft = jax.nn.sigmoid((logits + noise) / tau)
    hard = jnp.round(soft)
    mask = 1.0 - jnp.eye(N, dtype=jnp.float32)
    return hard * mask[None], logits + noise


if __name__ == "__main__":
    # small shapes: batch=2, num_agents=8, dim_in_time=16, dim_in_node=16, hidden=32
    B, N = 2, 8
    dim_in_time, dim_in_node, hidden = 16, 16, 32
    D = dim_in_time + dim_in_node

    root = jax.random.PRNGKey(0)
    k_param, k_h, k_noise, k_sample = jax.random.split(root, 4)

    params = init_params(k_param, dim_in_time, dim_in_node, hidden)
    h = jax.random.normal(k_h, (B, N, D), jnp.float32)

    # --- Path 1: deterministic external logistic noise -> check vs reference.
    u = jax.random.uniform(k_noise, (B, N, N), jnp.float32,
                           minval=1e-6, maxval=1.0 - 1e-6)
    noise = jnp.log(u) - jnp.log1p(-u)

    adj = edge_predictor_forward(h, params, tau=1.0, noise=noise)
    adj = jax.block_until_ready(adj)
    ref, margin = reference_forward(h, params, noise, tau=1.0)

    assert adj.shape == (B, N, N)
    assert bool(jnp.all((adj == 0.0) | (adj == 1.0)))
    assert bool(jnp.all(jnp.diagonal(adj, axis1=1, axis2=2) == 0.0))
    # Robust 0/1 comparison: allow flips only where the decision margin is ~0
    # (Pallas vs XLA sigmoid lowerings may differ by an ulp at the boundary).
    mismatch = adj != ref
    assert bool(jnp.all(~mismatch | (jnp.abs(margin) < 1e-4))), "mismatch vs reference"

    # --- Path 2: sampled noise drawn in the wrapper (jax.random).
    adj2 = edge_predictor_forward(h, params, key=k_sample)
    adj2 = jax.block_until_ready(adj2)
    assert adj2.shape == (B, N, N)
    assert bool(jnp.all((adj2 == 0.0) | (adj2 == 1.0)))
    assert bool(jnp.all(jnp.diagonal(adj2, axis1=1, axis2=2) == 0.0))

    print("KERNEL_OK")
</pallas_src>

<mosaic_0001>
module attributes {stable_mosaic.version = 11 : i64} {
  func.func @proj_kernel(%arg0: i32, %arg1: i32, %arg2: memref<1x8x32xf32, #tpu.memory_space<vmem>>, %arg3: memref<32x32xf32, #tpu.memory_space<vmem>>, %arg4: memref<1x32xf32, #tpu.memory_space<vmem>>, %arg5: memref<32x32xf32, #tpu.memory_space<vmem>>, %arg6: memref<1x32xf32, #tpu.memory_space<vmem>>, %arg7: memref<1x8x32xf32, #tpu.memory_space<vmem>>, %arg8: memref<1x8x32xf32, #tpu.memory_space<vmem>>) attributes {dimension_semantics = [#tpu.dimension_semantics<parallel>, #tpu.dimension_semantics<parallel>], iteration_bounds = array<i64: 2, 1>, scalar_prefetch = 0 : i64, scratch_operands = 0 : i64, tpu.core_type = #tpu.core_type<tc>, window_params = [{transform_indices = @transform_0, window_bounds = array<i64: 1, 8, 32>}, {pipeline_mode = #tpu.pipeline_mode<synchronous>, transform_indices = @transform_1, window_bounds = array<i64: 32, 32>}, {pipeline_mode = #tpu.pipeline_mode<synchronous>, transform_indices = @transform_2, window_bounds = array<i64: 1, 32>}, {pipeline_mode = #tpu.pipeline_mode<synchronous>, transform_indices = @transform_3, window_bounds = array<i64: 32, 32>}, {pipeline_mode = #tpu.pipeline_mode<synchronous>, transform_indices = @transform_4, window_bounds = array<i64: 1, 32>}, {transform_indices = @transform_5, window_bounds = array<i64: 1, 8, 32>}, {transform_indices = @transform_6, window_bounds = array<i64: 1, 8, 32>}]} {
    %c0 = arith.constant 0 : index
    %c0_0 = arith.constant 0 : index
    %c0_1 = arith.constant 0 : index
    %0 = vector.load %arg2[%c0, %c0_0, %c0_1] : memref<1x8x32xf32, #tpu.memory_space<vmem>>, vector<1x8x32xf32>
    %1 = vector.shape_cast %0 : vector<1x8x32xf32> to vector<8x32xf32>
    %c0_2 = arith.constant 0 : index
    %c0_3 = arith.constant 0 : index
    %2 = vector.load %arg3[%c0_2, %c0_3] : memref<32x32xf32, #tpu.memory_space<vmem>>, vector<32x32xf32>
    %cst = arith.constant dense<0.000000e+00> : vector<8x32xf32>
    %3 = tpu.matmul %1, %2, %cst {dimension_numbers = #tpu.dot_dimension_numbers<[1], [0], [0], [1], [0, 0, 1, 1], [], []>} : vector<8x32xf32>, vector<32x32xf32>, vector<8x32xf32> -> vector<8x32xf32>
    %c0_4 = arith.constant 0 : index
    %c0_5 = arith.constant 0 : index
    %4 = vector.load %arg4[%c0_4, %c0_5] : memref<1x32xf32, #tpu.memory_space<vmem>>, vector<1x32xf32>
    %5 = vector.broadcast %4 : vector<1x32xf32> to vector<8x32xf32>
    %6 = arith.addf %3, %5 : vector<8x32xf32>
    %c0_6 = arith.constant 0 : index
    %c0_7 = arith.constant 0 : index
    %c0_8 = arith.constant 0 : index
    %7 = vector.load %arg7[%c0_6, %c0_7, %c0_8] : memref<1x8x32xf32, #tpu.memory_space<vmem>>, vector<1x8x32xf32>
    %8 = vector.shape_cast %7 : vector<1x8x32xf32> to vector<8x32xf32>
    %9 = vector.shape_cast %6 : vector<8x32xf32> to vector<1x8x32xf32>
    tpu.vector_store %arg7[%c0_6, %c0_7, %c0_8], %9 {strides = array<i32>} : memref<1x8x32xf32, #tpu.memory_space<vmem>>, vector<1x8x32xf32>,
    %c0_9 = arith.constant 0 : index
    %c0_10 = arith.constant 0 : index
    %10 = vector.load %arg5[%c0_9, %c0_10] : memref<32x32xf32, #tpu.memory_space<vmem>>, vector<32x32xf32>
    %cst_11 = arith.constant dense<0.000000e+00> : vector<8x32xf32>
    %11 = tpu.matmul %1, %10, %cst_11 {dimension_numbers = #tpu.dot_dimension_numbers<[1], [0], [0], [1], [0, 0, 1, 1], [], []>} : vector<8x32xf32>, vector<32x32xf32>, vector<8x32xf32> -> vector<8x32xf32>
    %c0_12 = arith.constant 0 : index
    %c0_13 = arith.constant 0 : index
    %12 = vector.load %arg6[%c0_12, %c0_13] : memref<1x32xf32, #tpu.memory_space<vmem>>, vector<1x32xf32>
    %13 = vector.broadcast %12 : vector<1x32xf32> to vector<8x32xf32>
    %14 = arith.addf %11, %13 : vector<8x32xf32>
    %c0_14 = arith.constant 0 : index
    %c0_15 = arith.constant 0 : index
    %c0_16 = arith.constant 0 : index
    %15 = vector.load %arg8[%c0_14, %c0_15, %c0_16] : memref<1x8x32xf32, #tpu.memory_space<vmem>>, vector<1x8x32xf32>
    %16 = vector.shape_cast %15 : vector<1x8x32xf32> to vector<8x32xf32>
    %17 = vector.shape_cast %14 : vector<8x32xf32> to vector<1x8x32xf32>
    tpu.vector_store %arg8[%c0_14, %c0_15, %c0_16], %17 {strides = array<i32>} : memref<1x8x32xf32, #tpu.memory_space<vmem>>, vector<1x8x32xf32>,
    return
  }
  func.func @transform_0(%arg0: i32, %arg1: i32) -> (i32, i32, i32) {
    %c0_i32 = arith.constant 0 : i32
    %c0_i32_0 = arith.constant 0 : i32
    return %arg0, %arg1, %c0_i32 : i32, i32, i32
  }
  func.func @transform_1(%arg0: i32, %arg1: i32) -> (i32, i32) {
    %c0_i32 = arith.constant 0 : i32
    %c0_i32_0 = arith.constant 0 : i32
    %c0_i32_1 = arith.constant 0 : i32
    return %c0_i32, %c0_i32_0 : i32, i32
  }
  func.func @transform_2(%arg0: i32, %arg1: i32) -> (i32, i32) {
    %c0_i32 = arith.constant 0 : i32
    %c0_i32_0 = arith.constant 0 : i32
    %c0_i32_1 = arith.constant 0 : i32
    return %c0_i32, %c0_i32_0 : i32, i32
  }
  func.func @transform_3(%arg0: i32, %arg1: i32) -> (i32, i32) {
    %c0_i32 = arith.constant 0 : i32
    %c0_i32_0 = arith.constant 0 : i32
    %c0_i32_1 = arith.constant 0 : i32
    return %c0_i32, %c0_i32_0 : i32, i32
  }
  func.func @transform_4(%arg0: i32, %arg1: i32) -> (i32, i32) {
    %c0_i32 = arith.constant 0 : i32
    %c0_i32_0 = arith.constant 0 : i32
    %c0_i32_1 = arith.constant 0 : i32
    return %c0_i32, %c0_i32_0 : i32, i32
  }
  func.func @transform_5(%arg0: i32, %arg1: i32) -> (i32, i32, i32) {
    %c0_i32 = arith.constant 0 : i32
    %c0_i32_0 = arith.constant 0 : i32
    return %arg0, %arg1, %c0_i32 : i32, i32, i32
  }
  func.func @transform_6(%arg0: i32, %arg1: i32) -> (i32, i32, i32) {
    %c0_i32 = arith.constant 0 : i32
    %c0_i32_0 = arith.constant 0 : i32
    return %arg0, %arg1, %c0_i32 : i32, i32, i32
  }
}

</mosaic_0001>

<llo_original>
// kernel: tpu_custom_call.1
$region0: #{tpu_custom_call.1}
  #allocation0 [shape = 'u32[]', space=smem, size = 0x4, offset = 0x4, fixed_abs, tag = 'smem constant byte address 0x4 - core index']
  #allocation1 [shape = 'u32[144,128]{1,0:T(1,128)}', space=vmem, size = 0x12000, scoped, tag = 'internal scratch']
  %s0 = inlined_call_operand.hbm [shape: f32[2,8,32], index: 0, kind: input, shape index: {}]
  %s1 = inlined_call_operand.hbm [shape: f32[32,32], index: 1, kind: input, shape index: {}]
  %s2 = inlined_call_operand.vmem [shape: f32[1,32], index: 2, kind: input, shape index: {}]
  %s3 = inlined_call_operand.hbm [shape: f32[32,32], index: 3, kind: input, shape index: {}]
  %s4 = inlined_call_operand.vmem [shape: f32[1,32], index: 4, kind: input, shape index: {}]
  %s5 = inlined_call_operand.hbm [shape: f32[2,8,32], index: 5, kind: output, shape index: {0}]
  %s6 = inlined_call_operand.hbm [shape: f32[2,8,32], index: 6, kind: output, shape index: {1}]
  %7 = xla_tuple %s5, %s6
  %s8 = sld [smem:[#allocation0]]
  $region73: #{tpu_custom_call.1} parent=0
    _
  %s10 = ssub.s32 1, %s8
  %s11 = scalar_select 0, %s10, %s8
  $region1: #{tpu_custom_call.1} parent=0
    #allocation2 [shape = 'u8[8192]{0}', space=vmem, size = 0x2000, scoped, tag = 'input window, operand 0']
    #allocation3 [shape = 's32[2]{0}', space=sflag, size = 0x8, scoped, tag = 'scoped memory for tpu_custom_call.1']
    #allocation4 [shape = 's32[2]{0}', space=sflag, size = 0x8, scoped, tag = 'scoped memory for tpu_custom_call.1']
    #allocation5 [shape = 'u8[16384]{0}', space=vmem, size = 0x4000, scoped, tag = 'input window, operand 1, single buffered']
    #allocation6 [shape = 's32[1]{0}', space=sflag, size = 0x4, scoped, tag = 'scoped memory for tpu_custom_call.1']
    #allocation7 [shape = 'u8[16384]{0}', space=vmem, size = 0x4000, scoped, tag = 'input window, operand 3, single buffered']
    #allocation8 [shape = 'u8[8192]{0}', space=vmem, size = 0x2000, scoped, tag = 'output window, operand 0']
    #allocation9 [shape = 'u8[8192]{0}', space=vmem, size = 0x2000, scoped, tag = 'output window, operand 1']
    #allocation10 [shape = 's32[2]{0}', space=sflag, size = 0x8, scoped, tag = 'scoped memory for tpu_custom_call.1']
    %12 = vsyncpa [#allocation3], 0
    %s13 = scalar_lea.sflag [#allocation3], 1
    %14 = vsyncpa %s13, 0
    %15 = vsyncpa [#allocation6], 0
    %16 = vsyncpa [#allocation4], 0
    %s17 = scalar_lea.sflag [#allocation4], 1
    %18 = vsyncpa %s17, 0
    %19 = vsyncpa [#allocation10], 0
    %s20 = scalar_lea.sflag [#allocation10], 1
    %21 = vsyncpa %s20, 0
    loop: start=0, step=1, limit=4
    $region2: #{tpu_custom_call.1} parent=1 // loop_pre_header
      _
    $region3: #{tpu_custom_call.1} parent=1 // loop_header
      %s23 = sphi 0, %s27
      %p24 = scmp.ge.s32.totalorder %s23, 4
      %s30 = sphi 0, %s42
      %s31 = sphi 0, %s38
      %s32 = sphi 0, %s30
      %s33 = sphi 0, %s31
      %s34 = sphi 0, %s32
      %s35 = sphi 0, %s33
      %s47 = sphi 0, %s49
      %s50 = sphi 0, %s47
      %s51 = sphi 0, %s50
      %s67 = sphi 0, %s51
      %s71 = sphi 0, %s71
      %s73 = sphi 0, %s71
      %s74 = sphi 0, %s73
      %s88 = sphi 0, %s74
      %s92 = sphi 0, %s92
      %s94 = sphi 0, %s92
      %s95 = sphi 0, %s94
      %s109 = sphi 0, %s95
      %s113 = sphi 0, %s113
      %s115 = sphi 0, %s113
      %s116 = sphi 0, %s115
      %s130 = sphi 0, %s116
      %s134 = sphi 0, %s134
      %s136 = sphi 0, %s134
      %s137 = sphi 0, %s136
      %s151 = sphi 0, %s137
      %s159 = sphi 0, %s161
      %s162 = sphi 0, %s159
      %s163 = sphi 0, %s162
      %s179 = sphi 0, %s163
      %s187 = sphi 0, %s189
      %s190 = sphi 0, %s187
      %s191 = sphi 0, %s190
      %s207 = sphi 0, %s191
    $region4: #{tpu_custom_call.1} parent=1 // loop_header_branch
      %26 = sbr.rel (%p24) target = $region8
    $region5: #{tpu_custom_call.1} parent=1 // loop_body
      %s28 = ssub.s32 %s23, 1
      %s29 = ssub.s32 %s23, 2
      %s36 = sadd.s32 1, %s31
      %p37 = scmp.ge.s32.totalorder %s36, 1
      %s38 = scalar_select %p37, 0, %s36
      %s39 = sadd.s32 1, %s30
      %s40 = scalar_select %p37, %s39, %s30
      %p41 = scmp.ge.s32.totalorder %s40, 2
      %s42 = scalar_select %p41, 0, %s40
      %s43 = ssub.s32 %s30, %s42
      %s44 = ssub.s32 %s31, %s38
      %s45 = sor.u32 %s43, %s44
      %p46 = scmp.eq.s32.totalorder %s45, 0
      %s48 = sadd.s32 %s47, 1
      %s49 = scalar_select %p46, %s47, %s48
      %p52 = pneg %p46
      %p53 = scmp.eq.s32.totalorder %s23, 1
      %p54 = por %p52, %p53
      %p55 = scmp.ne.s32.totalorder %s47, %s50
      %p56 = scmp.eq.s32.totalorder %s23, 0
      %p57 = por %p55, %p56
      %p58 = scmp.ne.s32.totalorder %s47, %s50
      %p59 = scmp.eq.s32.totalorder %s28, 1
      %p60 = por %p58, %p59
      %p61 = scmp.ne.s32.totalorder %s50, %s51
      %p62 = scmp.eq.s32.totalorder %s28, 0
      %p63 = por %p61, %p62
      %p64 = scmp.ne.s32.totalorder %s50, %s51
      %p65 = scmp.eq.s32.totalorder %s29, 1
      %p66 = por %p64, %p65
      %p68 = scmp.ne.s32.totalorder %s51, %s67
      %p69 = scmp.eq.s32.totalorder %s29, 0
      %p70 = por %p68, %p69
      %s72 = sadd.s32 %s71, 1
      %p75 = scmp.eq.s32.totalorder %s23, 1
      %p76 = scmp.ne.s32.totalorder %s71, %s73
      %p77 = scmp.eq.s32.totalorder %s23, 0
      %p78 = por %p76, %p77
      %p79 = scmp.ne.s32.totalorder %s71, %s73
      %p80 = scmp.eq.s32.totalorder %s28, 1
      %p81 = por %p79, %p80
      %p82 = scmp.ne.s32.totalorder %s73, %s74
      %p83 = scmp.eq.s32.totalorder %s28, 0
      %p84 = por %p82, %p83
      %p85 = scmp.ne.s32.totalorder %s73, %s74
      %p86 = scmp.eq.s32.totalorder %s29, 1
      %p87 = por %p85, %p86
      %p89 = scmp.ne.s32.totalorder %s74, %s88
      %p90 = scmp.eq.s32.totalorder %s29, 0
      %p91 = por %p89, %p90
      %s93 = sadd.s32 %s92, 1
      %p96 = scmp.eq.s32.totalorder %s23, 1
      %p97 = scmp.ne.s32.totalorder %s92, %s94
      %p98 = scmp.eq.s32.totalorder %s23, 0
      %p99 = por %p97, %p98
      %p100 = scmp.ne.s32.totalorder %s92, %s94
      %p101 = scmp.eq.s32.totalorder %s28, 1
      %p102 = por %p100, %p101
      %p103 = scmp.ne.s32.totalorder %s94, %s95
      %p104 = scmp.eq.s32.totalorder %s28, 0
      %p105 = por %p103, %p104
      %p106 = scmp.ne.s32.totalorder %s94, %s95
      %p107 = scmp.eq.s32.totalorder %s29, 1
      %p108 = por %p106, %p107
      %p110 = scmp.ne.s32.totalorder %s95, %s109
      %p111 = scmp.eq.s32.totalorder %s29, 0
      %p112 = por %p110, %p111
      %s114 = sadd.s32 %s113, 1
      %p117 = scmp.eq.s32.totalorder %s23, 1
      %p118 = scmp.ne.s32.totalorder %s113, %s115
      %p119 = scmp.eq.s32.totalorder %s23, 0
      %p120 = por %p118, %p119
      %p121 = scmp.ne.s32.totalorder %s113, %s115
      %p122 = scmp.eq.s32.totalorder %s28, 1
      %p123 = por %p121, %p122
      %p124 = scmp.ne.s32.totalorder %s115, %s116
      %p125 = scmp.eq.s32.totalorder %s28, 0
      %p126 = por %p124, %p125
      %p127 = scmp.ne.s32.totalorder %s115, %s116
      %p128 = scmp.eq.s32.totalorder %s29, 1
      %p129 = por %p127, %p128
      %p131 = scmp.ne.s32.totalorder %s116, %s130
      %p132 = scmp.eq.s32.totalorder %s29, 0
      %p133 = por %p131, %p132
      %s135 = sadd.s32 %s134, 1
      %p138 = scmp.eq.s32.totalorder %s23, 1
      %p139 = scmp.ne.s32.totalorder %s134, %s136
      %p140 = scmp.eq.s32.totalorder %s23, 0
      %p141 = por %p139, %p140
      %p142 = scmp.ne.s32.totalorder %s134, %s136
      %p143 = scmp.eq.s32.totalorder %s28, 1
      %p144 = por %p142, %p143
      %p145 = scmp.ne.s32.totalorder %s136, %s137
      %p146 = scmp.eq.s32.totalorder %s28, 0
      %p147 = por %p145, %p146
      %p148 = scmp.ne.s32.totalorder %s136, %s137
      %p149 = scmp.eq.s32.totalorder %s29, 1
      %p150 = por %p148, %p149
      %p152 = scmp.ne.s32.totalorder %s137, %s151
      %p153 = scmp.eq.s32.totalorder %s29, 0
      %p154 = por %p152, %p153
      %s155 = ssub.s32 %s30, %s42
      %s156 = ssub.s32 %s31, %s38
      %s157 = sor.u32 %s155, %s156
      %p158 = scmp.eq.s32.totalorder %s157, 0
      %s160 = sadd.s32 %s159, 1
      %s161 = scalar_select %p158, %s159, %s160
      %p164 = pneg %p158
      %p165 = scmp.eq.s32.totalorder %s23, 1
      %p166 = por %p164, %p165
      %p167 = scmp.ne.s32.totalorder %s159, %s162
      %p168 = scmp.eq.s32.totalorder %s23, 0
      %p169 = por %p167, %p168
      %p170 = scmp.ne.s32.totalorder %s159, %s162
      %p171 = scmp.eq.s32.totalorder %s28, 1
      %p172 = por %p170, %p171
      %p173 = scmp.ne.s32.totalorder %s162, %s163
      %p174 = scmp.eq.s32.totalorder %s28, 0
      %p175 = por %p173, %p174
      %p176 = scmp.ne.s32.totalorder %s162, %s163
      %p177 = scmp.eq.s32.totalorder %s29, 1
      %p178 = por %p176, %p177
      %p180 = scmp.ne.s32.totalorder %s163, %s179
      %p181 = scmp.eq.s32.totalorder %s29, 0
      %p182 = por %p180, %p181
      %s183 = ssub.s32 %s30, %s42
      %s184 = ssub.s32 %s31, %s38
      %s185 = sor.u32 %s183, %s184
      %p186 = scmp.eq.s32.totalorder %s185, 0
      %s188 = sadd.s32 %s187, 1
      %s189 = scalar_select %p186, %s187, %s188
      %p192 = pneg %p186
      %p193 = scmp.eq.s32.totalorder %s23, 1
      %p194 = por %p192, %p193
      %p195 = scmp.ne.s32.totalorder %s187, %s190
      %p196 = scmp.eq.s32.totalorder %s23, 0
      %p197 = por %p195, %p196
      %p198 = scmp.ne.s32.totalorder %s187, %s190
      %p199 = scmp.eq.s32.totalorder %s28, 1
      %p200 = por %p198, %p199
      %p201 = scmp.ne.s32.totalorder %s190, %s191
      %p202 = scmp.eq.s32.totalorder %s28, 0
      %p203 = por %p201, %p202
      %p204 = scmp.ne.s32.totalorder %s190, %s191
      %p205 = scmp.eq.s32.totalorder %s29, 1
      %p206 = por %p204, %p205
      %p208 = scmp.ne.s32.totalorder %s191, %s207
      %p209 = scmp.eq.s32.totalorder %s29, 0
      %p210 = por %p208, %p209
      %p211 = scmp.le.s32.totalorder 1, %s23
      %p212 = scmp.lt.s32.totalorder %s23, 3
      %p213 = pnand %p211, %p212
      %p214 = pneg %p213
      // Predicated region
      $region9: #{tpu_custom_call.1} parent=5 // pred_check
        _
      $region10: #{tpu_custom_call.1} parent=5 // pred_check_branch
        %216 = sbr.rel (%p213) target = $region12
      $region11: #{tpu_custom_call.1} parent=5 // pred_region
        %s217 = ssub.s32 %s23, 1
        // Predicated region
        $region13: #{tpu_custom_call.1} parent=11 // pred_check
          %p218 = pneg %p84
        $region14: #{tpu_custom_call.1} parent=11 // pred_check_branch
          %220 = sbr.rel (%p218) target = $region16
        $region15: #{tpu_custom_call.1} parent=11 // pred_region
          %s222 = ssub.s32 512, 512
          %223 = vsyncadd [#allocation6], %s222
          %s224 = sshll.u32 [#allocation5], 4
          %s225 = int_to_ptr.vmem [resolvable:$true] %s224
          %230 = dma.hbm_to_vmem [thread:$0]  %s1, 512, %s225, [#allocation6], 128, 128, 8
        $region16: #{tpu_custom_call.1} parent=11 // pred_fallthru
          _
        // Predicated region
        $region17: #{tpu_custom_call.1} parent=11 // pred_check
          %p231 = pneg %p105
        $region18: #{tpu_custom_call.1} parent=11 // pred_check_branch
          %233 = sbr.rel (%p231) target = $region20
        $region19: #{tpu_custom_call.1} parent=11 // pred_region
          _
        $region20: #{tpu_custom_call.1} parent=11 // pred_fallthru
          _
        // Predicated region
        $region21: #{tpu_custom_call.1} parent=11 // pred_check
          %p234 = pneg %p126
        $region22: #{tpu_custom_call.1} parent=11 // pred_check_branch
          %236 = sbr.rel (%p234) target = $region24
        $region23: #{tpu_custom_call.1} parent=11 // pred_region
          %s238 = ssub.s32 512, 512
          %239 = vsyncadd [#allocation6], %s238
          %s240 = sshll.u32 [#allocation7], 4
          %s241 = int_to_ptr.vmem [resolvable:$true] %s240
          %246 = dma.hbm_to_vmem [thread:$0]  %s3, 512, %s241, [#allocation6], 128, 128, 8
        $region24: #{tpu_custom_call.1} parent=11 // pred_fallthru
          _
        // Predicated region
        $region25: #{tpu_custom_call.1} parent=11 // pred_check
          %p247 = pneg %p147
        $region26: #{tpu_custom_call.1} parent=11 // pred_check_branch
          %249 = sbr.rel (%p247) target = $region28
        $region27: #{tpu_custom_call.1} parent=11 // pred_region
          _
        $region28: #{tpu_custom_call.1} parent=11 // pred_fallthru
          _
      $region12: #{tpu_custom_call.1} parent=5 // pred_fallthru
        _
      %p250 = scmp.lt.s32.totalorder %s23, 2
      // Predicated region
      $region29: #{tpu_custom_call.1} parent=5 // pred_check
        %p251 = pneg %p250
      $region30: #{tpu_custom_call.1} parent=5 // pred_check_branch
        %253 = sbr.rel (%p251) target = $region32
      $region31: #{tpu_custom_call.1} parent=5 // pred_region
        // Predicated region
        $region33: #{tpu_custom_call.1} parent=31 // pred_check
          %p254 = pneg %p57
        $region34: #{tpu_custom_call.1} parent=31 // pred_check_branch
          %256 = sbr.rel (%p254) target = $region36
        $region35: #{tpu_custom_call.1} parent=31 // pred_region
          %s257 = sand.u32 %s47, 1
          %s258 = scalar_lea.sflag [#allocation3], %s257
          %s259 = sand.u32 %s47, 1
          %s260 = smul.addr %s259, 8
          %s261 = scalar_lea.vmem [#allocation2], %s260
          %s263 = ssub.s32 128, 128
          %264 = vsyncadd %s258, %s263
          %s265 = sadd.s32 %s31, %s30
          %s266 = smul.addr %s265, 128
          %s267 = scalar_lea.hbm %s0, %s266
          %s269 = sshll.u32 %s261, 4
          %s270 = int_to_ptr.vmem [resolvable:$true] %s269
          %272 = dma.hbm_to_vmem [thread:$0]  %s267, 128, %s270, %s258
        $region36: #{tpu_custom_call.1} parent=31 // pred_fallthru
          _
      $region32: #{tpu_custom_call.1} parent=5 // pred_fallthru
        _
      %p273 = scmp.le.s32.totalorder 1, %s23
      %p274 = scmp.lt.s32.totalorder %s23, 3
      %p275 = pnand %p273, %p274
      %p276 = pneg %p275
      // Predicated region
      $region37: #{tpu_custom_call.1} parent=5 // pred_check
        _
      $region38: #{tpu_custom_call.1} parent=5 // pred_check_branch
        %278 = sbr.rel (%p275) target = $region40
      $region39: #{tpu_custom_call.1} parent=5 // pred_region
        %s279 = ssub.s32 %s23, 1
        %s280 = sand.u32 %s50, 1
        %s281 = scalar_lea.sflag [#allocation3], %s280
        %s282 = sand.u32 %s50, 1
        %s283 = smul.addr %s282, 8
        %s284 = scalar_lea.vmem [#allocation2], %s283
        // Predicated region
        $region41: #{tpu_custom_call.1} parent=39 // pred_check
          %p285 = pneg %p63
        $region42: #{tpu_custom_call.1} parent=39 // pred_check_branch
          %287 = sbr.rel (%p285) target = $region44
        $region43: #{tpu_custom_call.1} parent=39 // pred_region
          %288 = dma.done %s281, 128
        $region44: #{tpu_custom_call.1} parent=39 // pred_fallthru
          _
        // Predicated region
        $region45: #{tpu_custom_call.1} parent=39 // pred_check
          %p289 = pneg %p84
        $region46: #{tpu_custom_call.1} parent=39 // pred_check_branch
          %291 = sbr.rel (%p289) target = $region48
        $region47: #{tpu_custom_call.1} parent=39 // pred_region
          %292 = dma.done [#allocation6], 512
        $region48: #{tpu_custom_call.1} parent=39 // pred_fallthru
          _
        // Predicated region
        $region49: #{tpu_custom_call.1} parent=39 // pred_check
          %p293 = pneg %p126
        $region50: #{tpu_custom_call.1} parent=39 // pred_check_branch
          %295 = sbr.rel (%p293) target = $region52
        $region51: #{tpu_custom_call.1} parent=39 // pred_region
          %296 = dma.done [#allocation6], 512
        $region52: #{tpu_custom_call.1} parent=39 // pred_fallthru
          _
        %s297 = sand.u32 %s50, 1
        %s298 = scalar_lea.sflag [#allocation3], %s297
        %s299 = sand.u32 %s50, 1
        %s300 = smul.addr %s299, 8
        %s301 = scalar_lea.vmem [#allocation2], %s300
        %p302 = pneg %p63
        %p303 = pneg %p60
        %p304 = pneg %p84
        %p305 = pneg %p81
        %p306 = pneg %p105
        %p307 = pneg %p102
        %p308 = pneg %p126
        %p309 = pneg %p123
        %p310 = pneg %p147
        %p311 = pneg %p144
        %p312 = pneg %p175
        %p313 = pneg %p172
        %s314 = sand.u32 %s162, 1
        %s315 = scalar_lea.sflag [#allocation4], %s314
        %s316 = sand.u32 %s162, 1
        %s317 = smul.addr %s316, 8
        %s318 = scalar_lea.vmem [#allocation8], %s317
        %p319 = pneg %p203
        %p320 = pneg %p200
        %s321 = sand.u32 %s190, 1
        %s322 = scalar_lea.sflag [#allocation10], %s321
        %s323 = sand.u32 %s190, 1
        %s324 = smul.addr %s323, 8
        %s325 = scalar_lea.vmem [#allocation9], %s324
        %v326 = vld [vmem:[%s284] sm:$0xff]
        %v327 = vld [vmem:[#allocation5] sm:$0xff]
        %v328 = vld [vmem:[#allocation5 + $0x8] sm:$0xff]
        %v329 = vld [vmem:[#allocation5 + $0x10] sm:$0xff]
        %v330 = vld [vmem:[#allocation5 + $0x18] sm:$0xff]
        %v331 = vld [vmem:[%s2] sm:$0x1]
        %v333 = vlaneseq
        %v334 = vshrl.u32 %v333, 7
        %v335 = vsub.s32 0, %v334
        %v336 = vrot.slane %v331, %v335
        %vm338 = vcmask 261120
        %v340 = vsel %vm338, %v326, 0
        %342 = vmatprep.subr.mxu0 0.0
        %343 = vmatpush1.msra.mxu0 %v327
        %344 = vmatprep.subr.mxu0 0.0
        %345 = vmatpush1.msra.mxu0 %v328
        %346 = vmatprep.subr.mxu0 0.0
        %347 = vmatpush1.msra.mxu0 %v329
        %348 = vmatprep.subr.mxu0 0.0
        %349 = vmatpush1.msra.mxu0 %v330
        %350 = vmatprep.subr.mxu0 0.0
        %351 = vmatpush1.msra.mxu0 0.0
        %352 = vmatprep.subr.mxu0 0.0
        %353 = vmatpush1.msra.mxu0 0.0
        %354 = vmatprep.subr.mxu0 0.0
        %355 = vmatpush1.msra.mxu0 0.0
        %356 = vmatprep.subr.mxu0 0.0
        %357 = vmatpush1.msra.mxu0 0.0
        %358 = vmatprep.subr.mxu0 0.0
        %359 = vmatpush1.msra.mxu0 0.0
        %360 = vmatprep.subr.mxu0 0.0
        %361 = vmatpush1.msra.mxu0 0.0
        %362 = vmatprep.subr.mxu0 0.0
        %363 = vmatpush1.msra.mxu0 0.0
        %364 = vmatprep.subr.mxu0 0.0
        %365 = vmatpush1.msra.mxu0 0.0
        %366 = vmatprep.subr.mxu0 0.0
        %367 = vmatpush1.msra.mxu0 0.0
        %368 = vmatprep.subr.mxu0 0.0
        %369 = vmatpush1.msra.mxu0 0.0
        %370 = vmatprep.subr.mxu0 0.0
        %371 = vmatpush1.msra.mxu0 0.0
        %372 = vmatprep.subr.mxu0 0.0
        %373 = vmatpush1.msra.mxu0 0.0
        %374 = vmatprep.subr.mxu0 0.0
        %375 = vmatpush1.msra.mxu0 0.0
        %376 = vmatprep.subr.mxu0 0.0
        %377 = vmatpush1.msra.mxu0 0.0
        %378 = vmatprep.subr.mxu0 0.0
        %379 = vmatpush1.msra.mxu0 0.0
        %380 = vmatprep.subr.mxu0 0.0
        %381 = vmatpush1.msra.mxu0 0.0
        %382 = vmatprep.subr.mxu0 0.0
        %383 = vmatpush1.msra.mxu0 0.0
        %384 = vmatprep.subr.mxu0 0.0
        %385 = vmatpush1.msra.mxu0 0.0
        %386 = vmatprep.subr.mxu0 0.0
        %387 = vmatpush1.msra.mxu0 0.0
        %388 = vmatprep.subr.mxu0 0.0
        %389 = vmatpush1.msra.mxu0 0.0
        %390 = vmatprep.subr.mxu0 0.0
        %391 = vmatpush1.msra.mxu0 0.0
        %392 = vmatprep.subr.mxu0 0.0
        %393 = vmatpush1.msra.mxu0 0.0
        %394 = vmatprep.subr.mxu0 0.0
        %395 = vmatpush1.msra.mxu0 0.0
        %396 = vmatprep.subr.mxu0 0.0
        %397 = vmatpush1.msra.mxu0 0.0
        %398 = vmatprep.subr.mxu0 0.0
        %399 = vmatpush1.msra.mxu0 0.0
        %400 = vmatprep.subr.mxu0 0.0
        %401 = vmatpush1.msra.mxu0 0.0
        %402 = vmatprep.subr.mxu0 0.0
        %403 = vmatpush1.msra.mxu0 0.0
        %404 = vmatprep.subr.mxu0 0.0
        %405 = vmatpush1.msra.mxu0 0.0
        %406 = vmatprep.mubr.f32.mxu0 0.0
        %407 = vmatmul.mubr.f32.gmra.mrb[0].mxu0 %v340
        %v408 = vpop.f32.mrb[0].mxu0
        %v409 = vadd.f32 %v336, %v408
        %v410 = vpop.f32.mrb[0].mxu0
        %411 = vdwg.mxu0
        %412 = vst.msk [vmem:[%s318] sm:$0xff] %vm338, %v409
        %v413 = vld [vmem:[#allocation7] sm:$0xff]
        %v414 = vld [vmem:[#allocation7 + $0x8] sm:$0xff]
        %v415 = vld [vmem:[#allocation7 + $0x10] sm:$0xff]
        %v416 = vld [vmem:[#allocation7 + $0x18] sm:$0xff]
        %v417 = vld [vmem:[%s4] sm:$0x1]
        %v419 = vlaneseq
        %v420 = vshrl.u32 %v419, 7
        %v421 = vsub.s32 0, %v420
        %v422 = vrot.slane %v417, %v421
        %424 = vmatprep.subr.mxu0 0.0
        %425 = vmatpush1.msra.mxu0 %v413
        %426 = vmatprep.subr.mxu0 0.0
        %427 = vmatpush1.msra.mxu0 %v414
        %428 = vmatprep.subr.mxu0 0.0
        %429 = vmatpush1.msra.mxu0 %v415
        %430 = vmatprep.subr.mxu0 0.0
        %431 = vmatpush1.msra.mxu0 %v416
        %432 = vmatprep.subr.mxu0 0.0
        %433 = vmatpush1.msra.mxu0 0.0
        %434 = vmatprep.subr.mxu0 0.0
        %435 = vmatpush1.msra.mxu0 0.0
        %436 = vmatprep.subr.mxu0 0.0
        %437 = vmatpush1.msra.mxu0 0.0
        %438 = vmatprep.subr.mxu0 0.0
        %439 = vmatpush1.msra.mxu0 0.0
        %440 = vmatprep.subr.mxu0 0.0
        %441 = vmatpush1.msra.mxu0 0.0
        %442 = vmatprep.subr.mxu0 0.0
        %443 = vmatpush1.msra.mxu0 0.0
        %444 = vmatprep.subr.mxu0 0.0
        %445 = vmatpush1.msra.mxu0 0.0
        %446 = vmatprep.subr.mxu0 0.0
        %447 = vmatpush1.msra.mxu0 0.0
        %448 = vmatprep.subr.mxu0 0.0
        %449 = vmatpush1.msra.mxu0 0.0
        %450 = vmatprep.subr.mxu0 0.0
        %451 = vmatpush1.msra.mxu0 0.0
        %452 = vmatprep.subr.mxu0 0.0
        %453 = vmatpush1.msra.mxu0 0.0
        %454 = vmatprep.subr.mxu0 0.0
        %455 = vmatpush1.msra.mxu0 0.0
        %456 = vmatprep.subr.mxu0 0.0
        %457 = vmatpush1.msra.mxu0 0.0
        %458 = vmatprep.subr.mxu0 0.0
        %459 = vmatpush1.msra.mxu0 0.0
        %460 = vmatprep.subr.mxu0 0.0
        %461 = vmatpush1.msra.mxu0 0.0
        %462 = vmatprep.subr.mxu0 0.0
        %463 = vmatpush1.msra.mxu0 0.0
        %464 = vmatprep.subr.mxu0 0.0
        %465 = vmatpush1.msra.mxu0 0.0
        %466 = vmatprep.subr.mxu0 0.0
        %467 = vmatpush1.msra.mxu0 0.0
        %468 = vmatprep.subr.mxu0 0.0
        %469 = vmatpush1.msra.mxu0 0.0
        %470 = vmatprep.subr.mxu0 0.0
        %471 = vmatpush1.msra.mxu0 0.0
        %472 = vmatprep.subr.mxu0 0.0
        %473 = vmatpush1.msra.mxu0 0.0
        %474 = vmatprep.subr.mxu0 0.0
        %475 = vmatpush1.msra.mxu0 0.0
        %476 = vmatprep.subr.mxu0 0.0
        %477 = vmatpush1.msra.mxu0 0.0
        %478 = vmatprep.subr.mxu0 0.0
        %479 = vmatpush1.msra.mxu0 0.0
        %480 = vmatprep.subr.mxu0 0.0
        %481 = vmatpush1.msra.mxu0 0.0
        %482 = vmatprep.subr.mxu0 0.0
        %483 = vmatpush1.msra.mxu0 0.0
        %484 = vmatprep.subr.mxu0 0.0
        %485 = vmatpush1.msra.mxu0 0.0
        %486 = vmatprep.subr.mxu0 0.0
        %487 = vmatpush1.msra.mxu0 0.0
        %488 = vmatprep.mubr.f32.mxu0 0.0
        %489 = vmatmul.mubr.f32.gmra.mrb[0].mxu0 %v340
        %v490 = vpop.f32.mrb[0].mxu0
        %v491 = vadd.f32 %v422, %v490
        %v492 = vpop.f32.mrb[0].mxu0
        %493 = vdwg.mxu0
        %494 = vst.msk [vmem:[%s325] sm:$0xff] %vm338, %v491
        %s495 = sand.u32 %s162, 1
        %s496 = scalar_lea.sflag [#allocation4], %s495
        %s497 = sand.u32 %s162, 1
        %s498 = smul.addr %s497, 8
        %s499 = scalar_lea.vmem [#allocation8], %s498
        %s500 = sand.u32 %s190, 1
        %s501 = scalar_lea.sflag [#allocation10], %s500
        %s502 = sand.u32 %s190, 1
        %s503 = smul.addr %s502, 8
        %s504 = scalar_lea.vmem [#allocation9], %s503
        // Predicated region
        $region53: #{tpu_custom_call.1} parent=39 // pred_check
          %p505 = pneg %p172
        $region54: #{tpu_custom_call.1} parent=39 // pred_check_branch
          %507 = sbr.rel (%p505) target = $region56
        $region55: #{tpu_custom_call.1} parent=39 // pred_region
          %s509 = ssub.s32 128, 128
          %510 = vsyncadd %s496, %s509
          %s511 = sadd.s32 %s33, %s32
          %s512 = smul.addr %s511, 128
          %s513 = scalar_lea.hbm %s5, %s512
          %s515 = sshll.u32 %s499, 4
          %s516 = int_to_ptr.vmem [resolvable:$true] %s515
          %518 = dma.vmem_to_hbm [thread:$0]  %s516, 128, %s513, %s496
        $region56: #{tpu_custom_call.1} parent=39 // pred_fallthru
          _
        // Predicated region
        $region57: #{tpu_custom_call.1} parent=39 // pred_check
          %p519 = pneg %p200
        $region58: #{tpu_custom_call.1} parent=39 // pred_check_branch
          %521 = sbr.rel (%p519) target = $region60
        $region59: #{tpu_custom_call.1} parent=39 // pred_region
          %s523 = ssub.s32 128, 128
          %524 = vsyncadd %s501, %s523
          %s525 = sadd.s32 %s33, %s32
          %s526 = smul.addr %s525, 128
          %s527 = scalar_lea.hbm %s6, %s526
          %s529 = sshll.u32 %s504, 4
          %s530 = int_to_ptr.vmem [resolvable:$true] %s529
          %532 = dma.vmem_to_hbm [thread:$0]  %s530, 128, %s527, %s501
        $region60: #{tpu_custom_call.1} parent=39 // pred_fallthru
          _
      $region40: #{tpu_custom_call.1} parent=5 // pred_fallthru
        _
      %p533 = scmp.le.s32.totalorder 2, %s23
      // Predicated region
      $region61: #{tpu_custom_call.1} parent=5 // pred_check
        %p534 = pneg %p533
      $region62: #{tpu_custom_call.1} parent=5 // pred_check_branch
        %536 = sbr.rel (%p534) target = $region64
      $region63: #{tpu_custom_call.1} parent=5 // pred_region
        %s537 = ssub.s32 %s23, 2
        // Predicated region
        $region65: #{tpu_custom_call.1} parent=63 // pred_check
          %p538 = pneg %p178
        $region66: #{tpu_custom_call.1} parent=63 // pred_check_branch
          %540 = sbr.rel (%p538) target = $region68
        $region67: #{tpu_custom_call.1} parent=63 // pred_region
          %s541 = sand.u32 %s163, 1
          %s542 = scalar_lea.sflag [#allocation4], %s541
          %s543 = sand.u32 %s163, 1
          %s544 = smul.addr %s543, 8
          %s545 = scalar_lea.vmem [#allocation8], %s544
          %546 = dma.done %s542, 128
        $region68: #{tpu_custom_call.1} parent=63 // pred_fallthru
          _
        // Predicated region
        $region69: #{tpu_custom_call.1} parent=63 // pred_check
          %p547 = pneg %p206
        $region70: #{tpu_custom_call.1} parent=63 // pred_check_branch
          %549 = sbr.rel (%p547) target = $region72
        $region71: #{tpu_custom_call.1} parent=63 // pred_region
          %s550 = sand.u32 %s191, 1
          %s551 = scalar_lea.sflag [#allocation10], %s550
          %s552 = sand.u32 %s191, 1
          %s553 = smul.addr %s552, 8
          %s554 = scalar_lea.vmem [#allocation9], %s553
          %555 = dma.done %s551, 128
        $region72: #{tpu_custom_call.1} parent=63 // pred_fallthru
          _
      $region64: #{tpu_custom_call.1} parent=5 // pred_fallthru
        _
    $region6: #{tpu_custom_call.1} parent=1 // loop_footer
      %s27 = sadd.s32 1, %s23
    $region7: #{tpu_custom_call.1} parent=1 // loop_footer_branch
      %22 = sbr.rel target = $region3
    $region8: #{tpu_custom_call.1} parent=1 // loop_exit
      _
    %556 = vsyncpa [#allocation3], 1
    %s557 = scalar_lea.sflag [#allocation3], 1
    %558 = vsyncpa %s557, 1
    %559 = vsyncpa [#allocation6], 1
    %560 = vsyncpa [#allocation4], 1
    %s561 = scalar_lea.sflag [#allocation4], 1
    %562 = vsyncpa %s561, 1
    %563 = vsyncpa [#allocation10], 1
    %s564 = scalar_lea.sflag [#allocation10], 1
    %565 = vsyncpa %s564, 1

</llo_original>
